<compile_context>
chip_gen: v7x
topology: tpu7x:2x2x1
jax: 0.10.0
libtpu: 0.0.40
codegen_flags: <defaults>
</compile_context>

<pallas_src>
import functools

import jax
import jax.numpy as jnp
import numpy as np
from jax.experimental import pallas as pl
from jax.experimental.pallas import tpu as pltpu

EPS = 1e-5  # InstanceNorm2d default eps

_TAPS = [(dh, dw) for dh in (-1, 0, 1) for dw in (-1, 0, 1)]


def _rblock_kernel(x_ref, w_ref, m_ref, o_ref, stack_ref, *, H, W, C):
    """Fused 3x3 conv (stride=1, pad=1, no bias) + InstanceNorm + ReLU.

    x_ref:     (B_blk, C, H*W) VMEM  batch slab; channels on sublanes,
                                     flattened spatial (lane-dense) on lanes.
    w_ref:     (C, 9*C)        VMEM  conv weight, columns ordered tap-major
                                     (col = (kh*3+kw)*C + ci).
    m_ref:     (9, H*W)        VMEM  per-tap 0/1 boundary masks (trace-time).
    o_ref:     (B_blk, C, H*W) VMEM  output, same lane-dense layout.
    stack_ref: (9*C, H*W)      VMEM  scratch holding the rolled+masked taps.
    """
    HW = H * W
    B_blk = x_ref.shape[0]
    inv_hw = 1.0 / HW

    w = w_ref[...]                                        # (C, 9*C), hoisted
    mask_rows = [m_ref[t:t + 1, :] for t in range(9)]     # (1, HW) each

    for b in range(B_blk):                                # static unroll
        x = x_ref[b].astype(jnp.float32)                  # (C, HW)

        # Build the (9*C, HW) tap stack: one roll + one mask-mul per tap,
        # applied to the whole (C, HW) block at once.
        for t, (dh, dw) in enumerate(_TAPS):
            s = dh * W + dw                               # lane offset
            if s == 0:
                shifted = x
            else:
                # shifted[c, l] = x[c, (l + s) mod HW]; wrap-around /
                # cross-row pollution is zeroed by the tap mask.
                shifted = pltpu.roll(x, (-s) % HW, axis=1)
            if (dh, dw) != (0, 0):                        # (0,0) mask all-true
                shifted = shifted * mask_rows[t]
            stack_ref[t * C:(t + 1) * C, :] = shifted

        # One MXU contraction: (C, 9*C) @ (9*C, HW) -> (C, HW).
        conv = jnp.dot(w, stack_ref[...], preferred_element_type=jnp.float32)

        # InstanceNorm2d (biased variance, no affine) on the whole block.
        mean = jnp.sum(conv, axis=1, keepdims=True) * inv_hw
        cen = conv - mean
        var = jnp.sum(cen * cen, axis=1, keepdims=True) * inv_hw
        y = cen * jax.lax.rsqrt(var + EPS)

        # ReLU + lane-dense (multiple-of-128) store.
        o_ref[b] = jnp.maximum(y, 0.0).astype(o_ref.dtype)


def rblock_forward(x_nchw, weight_oihw, *, stride=1):
    """RBlock forward. x_nchw: (N, C, H, W) f32; weight_oihw: (C, C, 3, 3) f32."""
    assert stride == 1, "kernel implements stride=1"
    # TODO(synk): stride > 1 would need a strided output gather in the kernel.
    N, C, H, W = x_nchw.shape
    HW = H * W

    x_flat = x_nchw.reshape(N, C, HW)          # free reshape, NCHW preserved

    # Weight -> (C_out, 9*C_in) with tap-major columns: col = (kh*3+kw)*C + ci.
    w_mat = jnp.transpose(weight_oihw, (0, 2, 3, 1)).reshape(C, 9 * C)

    # Trace-time boundary masks (replace explicit zero padding), one row/tap.
    lane = np.arange(HW)
    hh, ww = lane // W, lane % W
    masks_np = np.stack(
        [((hh + dh >= 0) & (hh + dh < H) & (ww + dw >= 0) & (ww + dw < W))
         .astype(np.float32) for dh, dw in _TAPS])
    masks = jnp.asarray(masks_np)              # (9, HW) f32 0/1

    # Batch blocking: keep >= 2 "parallel" grid steps so dual-TC v7x gets both
    # cores busy; merge the rest per step to amortize the ~0.35us/step serial
    # grid overhead on single-TC v5e/v6e.
    if N >= 2 and N % 2 == 0:
        images_per_step = N // 2
    else:
        images_per_step = 1
    grid = (N // images_per_step,)

    # TODO(synk): for non-toy C or H*W, tile the spatial axis (halo via the
    # roll+mask trick inside a larger block) and size blocks so the
    # double-buffered working set stays under ~32 MiB scoped VMEM (v7x: 64 MiB
    # physical ceiling).
    kernel = functools.partial(_rblock_kernel, H=H, W=W, C=C)

    out_flat = pl.pallas_call(
        kernel,
        out_shape=jax.ShapeDtypeStruct((N, C, HW), jnp.float32),
        grid=grid,
        in_specs=[
            pl.BlockSpec((images_per_step, C, HW), lambda b: (b, 0, 0)),
            pl.BlockSpec((C, 9 * C), lambda b: (0, 0)),
            pl.BlockSpec((9, HW), lambda b: (0, 0)),
        ],
        out_specs=pl.BlockSpec((images_per_step, C, HW), lambda b: (b, 0, 0)),
        scratch_shapes=[pltpu.VMEM((9 * C, HW), jnp.float32)],
        compiler_params=pltpu.CompilerParams(
            dimension_semantics=("parallel",)),
    )(x_flat, w_mat, masks)

    return out_flat.reshape(N, C, H, W)


def _reference(x_nchw, weight_oihw):
    """Pure-JAX reference mirroring the PyTorch module (for validation)."""
    out = jax.lax.conv_general_dilated(
        x_nchw, weight_oihw, window_strides=(1, 1), padding=((1, 1), (1, 1)),
        dimension_numbers=("NCHW", "OIHW", "NCHW"),
    )
    mean = jnp.mean(out, axis=(2, 3), keepdims=True)
    var = jnp.mean((out - mean) ** 2, axis=(2, 3), keepdims=True)
    out = (out - mean) * jax.lax.rsqrt(var + EPS)
    return jnp.maximum(out, 0.0)


if __name__ == "__main__":
    key = jax.random.PRNGKey(0)
    kx, kw = jax.random.split(key)

    N, C, H, W = 2, 4, 16, 16
    x = jax.random.normal(kx, (N, C, H, W), dtype=jnp.float32)
    # Deterministic conv weight (kaiming-like scale), shape (out, in, 3, 3).
    fan_in = C * 3 * 3
    weight = jax.random.normal(kw, (C, C, 3, 3), dtype=jnp.float32) * (
        2.0 / fan_in
    ) ** 0.5

    out = jax.block_until_ready(rblock_forward(x, weight))
    ref = jax.block_until_ready(_reference(x, weight))
    np.testing.assert_allclose(np.asarray(out), np.asarray(ref),
                               atol=1e-4, rtol=1e-4)

    print("KERNEL_OK")
</pallas_src>

<mosaic_0001>
module attributes {stable_mosaic.version = 11 : i64} {
  func.func @_rblock_kernel(%arg0: i32, %arg1: memref<1x4x256xf32, #tpu.memory_space<vmem>>, %arg2: memref<4x36xf32, #tpu.memory_space<vmem>>, %arg3: memref<9x256xf32, #tpu.memory_space<vmem>>, %arg4: memref<1x4x256xf32, #tpu.memory_space<vmem>>, %arg5: memref<36x256xf32, #tpu.memory_space<vmem>>) attributes {dimension_semantics = [#tpu.dimension_semantics<parallel>], iteration_bounds = array<i64: 2>, scalar_prefetch = 0 : i64, scratch_operands = 1 : i64, tpu.core_type = #tpu.core_type<tc>, window_params = [{transform_indices = @transform_0, window_bounds = array<i64: 1, 4, 256>}, {pipeline_mode = #tpu.pipeline_mode<synchronous>, transform_indices = @transform_1, window_bounds = array<i64: 4, 36>}, {pipeline_mode = #tpu.pipeline_mode<synchronous>, transform_indices = @transform_2, window_bounds = array<i64: 9, 256>}, {transform_indices = @transform_3, window_bounds = array<i64: 1, 4, 256>}]} {
    %c0 = arith.constant 0 : index
    %c0_0 = arith.constant 0 : index
    %0 = vector.load %arg2[%c0, %c0_0] : memref<4x36xf32, #tpu.memory_space<vmem>>, vector<4x36xf32>
    %c0_1 = arith.constant 0 : index
    %c0_2 = arith.constant 0 : index
    %1 = vector.load %arg3[%c0_1, %c0_2] : memref<9x256xf32, #tpu.memory_space<vmem>>, vector<1x256xf32>
    %c1 = arith.constant 1 : index
    %c0_3 = arith.constant 0 : index
    %2 = vector.load %arg3[%c1, %c0_3] : memref<9x256xf32, #tpu.memory_space<vmem>>, vector<1x256xf32>
    %c2 = arith.constant 2 : index
    %c0_4 = arith.constant 0 : index
    %3 = vector.load %arg3[%c2, %c0_4] : memref<9x256xf32, #tpu.memory_space<vmem>>, vector<1x256xf32>
    %c3 = arith.constant 3 : index
    %c0_5 = arith.constant 0 : index
    %4 = vector.load %arg3[%c3, %c0_5] : memref<9x256xf32, #tpu.memory_space<vmem>>, vector<1x256xf32>
    %c5 = arith.constant 5 : index
    %c0_6 = arith.constant 0 : index
    %5 = vector.load %arg3[%c5, %c0_6] : memref<9x256xf32, #tpu.memory_space<vmem>>, vector<1x256xf32>
    %c6 = arith.constant 6 : index
    %c0_7 = arith.constant 0 : index
    %6 = vector.load %arg3[%c6, %c0_7] : memref<9x256xf32, #tpu.memory_space<vmem>>, vector<1x256xf32>
    %c7 = arith.constant 7 : index
    %c0_8 = arith.constant 0 : index
    %7 = vector.load %arg3[%c7, %c0_8] : memref<9x256xf32, #tpu.memory_space<vmem>>, vector<1x256xf32>
    %c8 = arith.constant 8 : index
    %c0_9 = arith.constant 0 : index
    %8 = vector.load %arg3[%c8, %c0_9] : memref<9x256xf32, #tpu.memory_space<vmem>>, vector<1x256xf32>
    %c0_10 = arith.constant 0 : index
    %c0_11 = arith.constant 0 : index
    %c0_12 = arith.constant 0 : index
    %9 = vector.load %arg1[%c0_10, %c0_11, %c0_12] : memref<1x4x256xf32, #tpu.memory_space<vmem>>, vector<1x4x256xf32>
    %10 = vector.shape_cast %9 : vector<1x4x256xf32> to vector<4x256xf32>
    %c17_i32 = arith.constant 17 : i32
    %11 = tpu.dynamic_rotate %10 by %c17_i32 dim 1 : vector<4x256xf32>, i32 -> vector<4x256xf32>
    %12 = vector.broadcast %1 : vector<1x256xf32> to vector<4x256xf32>
    %13 = arith.mulf %11, %12 : vector<4x256xf32>
    %c0_13 = arith.constant 0 : index
    %c0_14 = arith.constant 0 : index
    %14 = vector.load %arg5[%c0_13, %c0_14] : memref<36x256xf32, #tpu.memory_space<vmem>>, vector<4x256xf32>
    tpu.vector_store %arg5[%c0_13, %c0_14], %13 {strides = array<i32>} : memref<36x256xf32, #tpu.memory_space<vmem>>, vector<4x256xf32>,
    %c16_i32 = arith.constant 16 : i32
    %15 = tpu.dynamic_rotate %10 by %c16_i32 dim 1 : vector<4x256xf32>, i32 -> vector<4x256xf32>
    %16 = vector.broadcast %2 : vector<1x256xf32> to vector<4x256xf32>
    %17 = arith.mulf %15, %16 : vector<4x256xf32>
    %c4 = arith.constant 4 : index
    %c0_15 = arith.constant 0 : index
    %18 = vector.load %arg5[%c4, %c0_15] : memref<36x256xf32, #tpu.memory_space<vmem>>, vector<4x256xf32>
    tpu.vector_store %arg5[%c4, %c0_15], %17 {strides = array<i32>} : memref<36x256xf32, #tpu.memory_space<vmem>>, vector<4x256xf32>,
    %c15_i32 = arith.constant 15 : i32
    %19 = tpu.dynamic_rotate %10 by %c15_i32 dim 1 : vector<4x256xf32>, i32 -> vector<4x256xf32>
    %20 = vector.broadcast %3 : vector<1x256xf32> to vector<4x256xf32>
    %21 = arith.mulf %19, %20 : vector<4x256xf32>
    %c8_16 = arith.constant 8 : index
    %c0_17 = arith.constant 0 : index
    %22 = vector.load %arg5[%c8_16, %c0_17] : memref<36x256xf32, #tpu.memory_space<vmem>>, vector<4x256xf32>
    tpu.vector_store %arg5[%c8_16, %c0_17], %21 {strides = array<i32>} : memref<36x256xf32, #tpu.memory_space<vmem>>, vector<4x256xf32>,
    %c1_i32 = arith.constant 1 : i32
    %23 = tpu.dynamic_rotate %10 by %c1_i32 dim 1 : vector<4x256xf32>, i32 -> vector<4x256xf32>
    %24 = vector.broadcast %4 : vector<1x256xf32> to vector<4x256xf32>
    %25 = arith.mulf %23, %24 : vector<4x256xf32>
    %c12 = arith.constant 12 : index
    %c0_18 = arith.constant 0 : index
    %26 = vector.load %arg5[%c12, %c0_18] : memref<36x256xf32, #tpu.memory_space<vmem>>, vector<4x256xf32>
    tpu.vector_store %arg5[%c12, %c0_18], %25 {strides = array<i32>} : memref<36x256xf32, #tpu.memory_space<vmem>>, vector<4x256xf32>,
    %c16 = arith.constant 16 : index
    %c0_19 = arith.constant 0 : index
    %27 = vector.load %arg5[%c16, %c0_19] : memref<36x256xf32, #tpu.memory_space<vmem>>, vector<4x256xf32>
    tpu.vector_store %arg5[%c16, %c0_19], %10 {strides = array<i32>} : memref<36x256xf32, #tpu.memory_space<vmem>>, vector<4x256xf32>,
    %c255_i32 = arith.constant 255 : i32
    %28 = tpu.dynamic_rotate %10 by %c255_i32 dim 1 : vector<4x256xf32>, i32 -> vector<4x256xf32>
    %29 = vector.broadcast %5 : vector<1x256xf32> to vector<4x256xf32>
    %30 = arith.mulf %28, %29 : vector<4x256xf32>
    %c20 = arith.constant 20 : index
    %c0_20 = arith.constant 0 : index
    %31 = vector.load %arg5[%c20, %c0_20] : memref<36x256xf32, #tpu.memory_space<vmem>>, vector<4x256xf32>
    tpu.vector_store %arg5[%c20, %c0_20], %30 {strides = array<i32>} : memref<36x256xf32, #tpu.memory_space<vmem>>, vector<4x256xf32>,
    %c241_i32 = arith.constant 241 : i32
    %32 = tpu.dynamic_rotate %10 by %c241_i32 dim 1 : vector<4x256xf32>, i32 -> vector<4x256xf32>
    %33 = vector.broadcast %6 : vector<1x256xf32> to vector<4x256xf32>
    %34 = arith.mulf %32, %33 : vector<4x256xf32>
    %c24 = arith.constant 24 : index
    %c0_21 = arith.constant 0 : index
    %35 = vector.load %arg5[%c24, %c0_21] : memref<36x256xf32, #tpu.memory_space<vmem>>, vector<4x256xf32>
    tpu.vector_store %arg5[%c24, %c0_21], %34 {strides = array<i32>} : memref<36x256xf32, #tpu.memory_space<vmem>>, vector<4x256xf32>,
    %c240_i32 = arith.constant 240 : i32
    %36 = tpu.dynamic_rotate %10 by %c240_i32 dim 1 : vector<4x256xf32>, i32 -> vector<4x256xf32>
    %37 = vector.broadcast %7 : vector<1x256xf32> to vector<4x256xf32>
    %38 = arith.mulf %36, %37 : vector<4x256xf32>
    %c28 = arith.constant 28 : index
    %c0_22 = arith.constant 0 : index
    %39 = vector.load %arg5[%c28, %c0_22] : memref<36x256xf32, #tpu.memory_space<vmem>>, vector<4x256xf32>
    tpu.vector_store %arg5[%c28, %c0_22], %38 {strides = array<i32>} : memref<36x256xf32, #tpu.memory_space<vmem>>, vector<4x256xf32>,
    %c239_i32 = arith.constant 239 : i32
    %40 = tpu.dynamic_rotate %10 by %c239_i32 dim 1 : vector<4x256xf32>, i32 -> vector<4x256xf32>
    %41 = vector.broadcast %8 : vector<1x256xf32> to vector<4x256xf32>
    %42 = arith.mulf %40, %41 : vector<4x256xf32>
    %c32 = arith.constant 32 : index
    %c0_23 = arith.constant 0 : index
    %43 = vector.load %arg5[%c32, %c0_23] : memref<36x256xf32, #tpu.memory_space<vmem>>, vector<4x256xf32>
    tpu.vector_store %arg5[%c32, %c0_23], %42 {strides = array<i32>} : memref<36x256xf32, #tpu.memory_space<vmem>>, vector<4x256xf32>,
    %c0_24 = arith.constant 0 : index
    %c0_25 = arith.constant 0 : index
    %44 = vector.load %arg5[%c0_24, %c0_25] : memref<36x256xf32, #tpu.memory_space<vmem>>, vector<36x256xf32>
    %cst = arith.constant dense<0.000000e+00> : vector<4x256xf32>
    %45 = tpu.matmul %0, %44, %cst {dimension_numbers = #tpu.dot_dimension_numbers<[1], [0], [0], [1], [0, 0, 1, 1], [], []>} : vector<4x36xf32>, vector<36x256xf32>, vector<4x256xf32> -> vector<4x256xf32>
    %cst_26 = arith.constant dense<0.000000e+00> : vector<4xf32>
    %46 = vector.multi_reduction <add>, %45, %cst_26 [1] : vector<4x256xf32> to vector<4xf32>
    %47 = vector.shape_cast %46 : vector<4xf32> to vector<4x1xf32>
    %cst_27 = arith.constant 3.906250e-03 : f32
    %48 = vector.broadcast %cst_27 : f32 to vector<4x1xf32>
    %49 = arith.mulf %47, %48 : vector<4x1xf32>
    %50 = vector.broadcast %49 : vector<4x1xf32> to vector<4x256xf32>
    %51 = arith.subf %45, %50 : vector<4x256xf32>
    %52 = arith.mulf %51, %51 : vector<4x256xf32>
    %cst_28 = arith.constant dense<0.000000e+00> : vector<4xf32>
    %53 = vector.multi_reduction <add>, %52, %cst_28 [1] : vector<4x256xf32> to vector<4xf32>
    %54 = vector.shape_cast %53 : vector<4xf32> to vector<4x1xf32>
    %cst_29 = arith.constant 3.906250e-03 : f32
    %55 = vector.broadcast %cst_29 : f32 to vector<4x1xf32>
    %56 = arith.mulf %54, %55 : vector<4x1xf32>
    %cst_30 = arith.constant 9.99999974E-6 : f32
    %57 = vector.broadcast %cst_30 : f32 to vector<4x1xf32>
    %58 = arith.addf %56, %57 : vector<4x1xf32>
    %59 = math.rsqrt %58 : vector<4x1xf32>
    %60 = vector.broadcast %59 : vector<4x1xf32> to vector<4x256xf32>
    %61 = arith.mulf %51, %60 : vector<4x256xf32>
    %cst_31 = arith.constant 0.000000e+00 : f32
    %62 = vector.broadcast %cst_31 : f32 to vector<4x256xf32>
    %63 = arith.maximumf %61, %62 : vector<4x256xf32>
    %c0_32 = arith.constant 0 : index
    %c0_33 = arith.constant 0 : index
    %c0_34 = arith.constant 0 : index
    %64 = vector.load %arg4[%c0_32, %c0_33, %c0_34] : memref<1x4x256xf32, #tpu.memory_space<vmem>>, vector<1x4x256xf32>
    %65 = vector.shape_cast %64 : vector<1x4x256xf32> to vector<4x256xf32>
    %66 = vector.shape_cast %63 : vector<4x256xf32> to vector<1x4x256xf32>
    tpu.vector_store %arg4[%c0_32, %c0_33, %c0_34], %66 {strides = array<i32>} : memref<1x4x256xf32, #tpu.memory_space<vmem>>, vector<1x4x256xf32>,
    return
  }
  func.func @transform_0(%arg0: i32) -> (i32, i32, i32) {
    %c0_i32 = arith.constant 0 : i32
    %c0_i32_0 = arith.constant 0 : i32
    %c0_i32_1 = arith.constant 0 : i32
    return %arg0, %c0_i32, %c0_i32_0 : i32, i32, i32
  }
  func.func @transform_1(%arg0: i32) -> (i32, i32) {
    %c0_i32 = arith.constant 0 : i32
    %c0_i32_0 = arith.constant 0 : i32
    %c0_i32_1 = arith.constant 0 : i32
    return %c0_i32, %c0_i32_0 : i32, i32
  }
  func.func @transform_2(%arg0: i32) -> (i32, i32) {
    %c0_i32 = arith.constant 0 : i32
    %c0_i32_0 = arith.constant 0 : i32
    %c0_i32_1 = arith.constant 0 : i32
    return %c0_i32, %c0_i32_0 : i32, i32
  }
  func.func @transform_3(%arg0: i32) -> (i32, i32, i32) {
    %c0_i32 = arith.constant 0 : i32
    %c0_i32_0 = arith.constant 0 : i32
    %c0_i32_1 = arith.constant 0 : i32
    return %arg0, %c0_i32, %c0_i32_0 : i32, i32, i32
  }
}

</mosaic_0001>

<llo_original>
// kernel: tpu_custom_call.1
$region0: #{tpu_custom_call.1}
  #allocation0 [shape = 'u32[]', space=smem, size = 0x4, offset = 0x4, fixed_abs, tag = 'smem constant byte address 0x4 - core index']
  #allocation1 [shape = 'u32[144,128]{1,0:T(1,128)}', space=vmem, size = 0x12000, scoped, tag = 'internal scratch']
  #allocation2 [shape = 'f32[36,256]{1,0:T(8,128)}', space=vmem, size = 0xa000, scoped, tag = 'scratch operand']
  %s0 = inlined_call_operand.hbm [shape: f32[2,4,256], index: 0, kind: input, shape index: {}]
  %s1 = inlined_call_operand.hbm [shape: f32[4,36], index: 1, kind: input, shape index: {}]
  %s2 = inlined_call_operand.hbm [shape: f32[9,256], index: 2, kind: input, shape index: {}]
  %s3 = inlined_call_operand.hbm [shape: f32[2,4,256], index: 3, kind: output, shape index: {}]
  %s4 = sld [smem:[#allocation0]]
  $region57: #{tpu_custom_call.1} parent=0
    _
  %s6 = ssub.s32 1, %s4
  %s7 = scalar_select 0, %s6, %s4
  $region1: #{tpu_custom_call.1} parent=0
    #allocation3 [shape = 'u8[8192]{0}', space=vmem, size = 0x2000, scoped, tag = 'input window, operand 0']
    #allocation4 [shape = 's32[2]{0}', space=sflag, size = 0x8, scoped, tag = 'scoped memory for tpu_custom_call.1']
    #allocation5 [shape = 's32[2]{0}', space=sflag, size = 0x8, scoped, tag = 'scoped memory for tpu_custom_call.1']
    #allocation6 [shape = 'u8[2048]{0}', space=vmem, size = 0x800, scoped, tag = 'input window, operand 1, single buffered']
    #allocation7 [shape = 's32[1]{0}', space=sflag, size = 0x4, scoped, tag = 'scoped memory for tpu_custom_call.1']
    #allocation8 [shape = 'u8[16384]{0}', space=vmem, size = 0x4000, scoped, tag = 'input window, operand 2, single buffered']
    #allocation9 [shape = 'u8[8192]{0}', space=vmem, size = 0x2000, scoped, tag = 'output window, operand 0']
    %8 = vsyncpa [#allocation4], 0
    %s9 = scalar_lea.sflag [#allocation4], 1
    %10 = vsyncpa %s9, 0
    %11 = vsyncpa [#allocation7], 0
    %12 = vsyncpa [#allocation5], 0
    %s13 = scalar_lea.sflag [#allocation5], 1
    %14 = vsyncpa %s13, 0
    loop: start=0, step=1, limit=4
    $region2: #{tpu_custom_call.1} parent=1 // loop_pre_header
      _
    $region3: #{tpu_custom_call.1} parent=1 // loop_header
      %s16 = sphi 0, %s20
      %p17 = scmp.ge.s32.totalorder %s16, 4
      %s26 = sphi 0, %s28
      %s29 = sphi 0, %s26
      %s30 = sphi 0, %s29
      %s46 = sphi 0, %s30
      %s50 = sphi 0, %s50
      %s52 = sphi 0, %s50
      %s53 = sphi 0, %s52
      %s67 = sphi 0, %s53
      %s71 = sphi 0, %s71
      %s73 = sphi 0, %s71
      %s74 = sphi 0, %s73
      %s88 = sphi 0, %s74
      %s94 = sphi 0, %s96
      %s97 = sphi 0, %s94
      %s98 = sphi 0, %s97
      %s114 = sphi 0, %s98
    $region4: #{tpu_custom_call.1} parent=1 // loop_header_branch
      %19 = sbr.rel (%p17) target = $region8
    $region5: #{tpu_custom_call.1} parent=1 // loop_body
      %s21 = ssub.s32 %s16, 1
      %s22 = ssub.s32 %s16, 2
      %s23 = sadd.s32 %s16, 1
      %s24 = ssub.s32 %s16, %s23
      %p25 = scmp.eq.s32.totalorder %s24, 0
      %s27 = sadd.s32 %s26, 1
      %s28 = scalar_select %p25, %s26, %s27
      %p31 = pneg %p25
      %p32 = scmp.eq.s32.totalorder %s16, 1
      %p33 = por %p31, %p32
      %p34 = scmp.ne.s32.totalorder %s26, %s29
      %p35 = scmp.eq.s32.totalorder %s16, 0
      %p36 = por %p34, %p35
      %p37 = scmp.ne.s32.totalorder %s26, %s29
      %p38 = scmp.eq.s32.totalorder %s21, 1
      %p39 = por %p37, %p38
      %p40 = scmp.ne.s32.totalorder %s29, %s30
      %p41 = scmp.eq.s32.totalorder %s21, 0
      %p42 = por %p40, %p41
      %p43 = scmp.ne.s32.totalorder %s29, %s30
      %p44 = scmp.eq.s32.totalorder %s22, 1
      %p45 = por %p43, %p44
      %p47 = scmp.ne.s32.totalorder %s30, %s46
      %p48 = scmp.eq.s32.totalorder %s22, 0
      %p49 = por %p47, %p48
      %s51 = sadd.s32 %s50, 1
      %p54 = scmp.eq.s32.totalorder %s16, 1
      %p55 = scmp.ne.s32.totalorder %s50, %s52
      %p56 = scmp.eq.s32.totalorder %s16, 0
      %p57 = por %p55, %p56
      %p58 = scmp.ne.s32.totalorder %s50, %s52
      %p59 = scmp.eq.s32.totalorder %s21, 1
      %p60 = por %p58, %p59
      %p61 = scmp.ne.s32.totalorder %s52, %s53
      %p62 = scmp.eq.s32.totalorder %s21, 0
      %p63 = por %p61, %p62
      %p64 = scmp.ne.s32.totalorder %s52, %s53
      %p65 = scmp.eq.s32.totalorder %s22, 1
      %p66 = por %p64, %p65
      %p68 = scmp.ne.s32.totalorder %s53, %s67
      %p69 = scmp.eq.s32.totalorder %s22, 0
      %p70 = por %p68, %p69
      %s72 = sadd.s32 %s71, 1
      %p75 = scmp.eq.s32.totalorder %s16, 1
      %p76 = scmp.ne.s32.totalorder %s71, %s73
      %p77 = scmp.eq.s32.totalorder %s16, 0
      %p78 = por %p76, %p77
      %p79 = scmp.ne.s32.totalorder %s71, %s73
      %p80 = scmp.eq.s32.totalorder %s21, 1
      %p81 = por %p79, %p80
      %p82 = scmp.ne.s32.totalorder %s73, %s74
      %p83 = scmp.eq.s32.totalorder %s21, 0
      %p84 = por %p82, %p83
      %p85 = scmp.ne.s32.totalorder %s73, %s74
      %p86 = scmp.eq.s32.totalorder %s22, 1
      %p87 = por %p85, %p86
      %p89 = scmp.ne.s32.totalorder %s74, %s88
      %p90 = scmp.eq.s32.totalorder %s22, 0
      %p91 = por %p89, %p90
      %s92 = ssub.s32 %s16, %s23
      %p93 = scmp.eq.s32.totalorder %s92, 0
      %s95 = sadd.s32 %s94, 1
      %s96 = scalar_select %p93, %s94, %s95
      %p99 = pneg %p93
      %p100 = scmp.eq.s32.totalorder %s16, 1
      %p101 = por %p99, %p100
      %p102 = scmp.ne.s32.totalorder %s94, %s97
      %p103 = scmp.eq.s32.totalorder %s16, 0
      %p104 = por %p102, %p103
      %p105 = scmp.ne.s32.totalorder %s94, %s97
      %p106 = scmp.eq.s32.totalorder %s21, 1
      %p107 = por %p105, %p106
      %p108 = scmp.ne.s32.totalorder %s97, %s98
      %p109 = scmp.eq.s32.totalorder %s21, 0
      %p110 = por %p108, %p109
      %p111 = scmp.ne.s32.totalorder %s97, %s98
      %p112 = scmp.eq.s32.totalorder %s22, 1
      %p113 = por %p111, %p112
      %p115 = scmp.ne.s32.totalorder %s98, %s114
      %p116 = scmp.eq.s32.totalorder %s22, 0
      %p117 = por %p115, %p116
      %p118 = scmp.le.s32.totalorder 1, %s16
      %p119 = scmp.lt.s32.totalorder %s16, 3
      %p120 = pnand %p118, %p119
      %p121 = pneg %p120
      // Predicated region
      $region9: #{tpu_custom_call.1} parent=5 // pred_check
        _
      $region10: #{tpu_custom_call.1} parent=5 // pred_check_branch
        %123 = sbr.rel (%p120) target = $region12
      $region11: #{tpu_custom_call.1} parent=5 // pred_region
        %s124 = ssub.s32 %s16, 1
        // Predicated region
        $region13: #{tpu_custom_call.1} parent=11 // pred_check
          %p125 = pneg %p63
        $region14: #{tpu_custom_call.1} parent=11 // pred_check_branch
          %127 = sbr.rel (%p125) target = $region16
        $region15: #{tpu_custom_call.1} parent=11 // pred_region
          %s129 = ssub.s32 64, 64
          %130 = vsyncadd [#allocation7], %s129
          %s132 = sshll.u32 [#allocation6], 4
          %s133 = int_to_ptr.vmem [resolvable:$true] %s132
          %135 = dma.hbm_to_vmem [thread:$0]  %s1, 64, %s133, [#allocation7]
        $region16: #{tpu_custom_call.1} parent=11 // pred_fallthru
          _
        // Predicated region
        $region17: #{tpu_custom_call.1} parent=11 // pred_check
          %p136 = pneg %p84
        $region18: #{tpu_custom_call.1} parent=11 // pred_check_branch
          %138 = sbr.rel (%p136) target = $region20
        $region19: #{tpu_custom_call.1} parent=11 // pred_region
          %s140 = ssub.s32 512, 512
          %141 = vsyncadd [#allocation7], %s140
          %s142 = sshll.u32 [#allocation8], 4
          %s143 = int_to_ptr.vmem [resolvable:$true] %s142
          %148 = dma.hbm_to_vmem [thread:$0]  %s2, 512, %s143, [#allocation7], 256, 256, 16
        $region20: #{tpu_custom_call.1} parent=11 // pred_fallthru
          _
      $region12: #{tpu_custom_call.1} parent=5 // pred_fallthru
        _
      %p149 = scmp.lt.s32.totalorder %s16, 2
      // Predicated region
      $region21: #{tpu_custom_call.1} parent=5 // pred_check
        %p150 = pneg %p149
      $region22: #{tpu_custom_call.1} parent=5 // pred_check_branch
        %152 = sbr.rel (%p150) target = $region24
      $region23: #{tpu_custom_call.1} parent=5 // pred_region
        // Predicated region
        $region25: #{tpu_custom_call.1} parent=23 // pred_check
          %p153 = pneg %p36
        $region26: #{tpu_custom_call.1} parent=23 // pred_check_branch
          %155 = sbr.rel (%p153) target = $region28
        $region27: #{tpu_custom_call.1} parent=23 // pred_region
          %s156 = sand.u32 %s26, 1
          %s157 = scalar_lea.sflag [#allocation4], %s156
          %s158 = sand.u32 %s26, 1
          %s159 = smul.addr %s158, 8
          %s160 = scalar_lea.vmem [#allocation3], %s159
          %s162 = ssub.s32 128, 128
          %163 = vsyncadd %s157, %s162
          %s164 = smul.addr %s16, 2
          %s165 = smul.addr %s164, 64
          %s166 = scalar_lea.hbm %s0, %s165
          %s168 = sshll.u32 %s160, 4
          %s169 = int_to_ptr.vmem [resolvable:$true] %s168
          %171 = dma.hbm_to_vmem [thread:$0]  %s166, 128, %s169, %s157
        $region28: #{tpu_custom_call.1} parent=23 // pred_fallthru
          _
      $region24: #{tpu_custom_call.1} parent=5 // pred_fallthru
        _
      %p172 = scmp.le.s32.totalorder 1, %s16
      %p173 = scmp.lt.s32.totalorder %s16, 3
      %p174 = pnand %p172, %p173
      %p175 = pneg %p174
      // Predicated region
      $region29: #{tpu_custom_call.1} parent=5 // pred_check
        _
      $region30: #{tpu_custom_call.1} parent=5 // pred_check_branch
        %177 = sbr.rel (%p174) target = $region32
      $region31: #{tpu_custom_call.1} parent=5 // pred_region
        %s178 = ssub.s32 %s16, 1
        %s179 = sand.u32 %s29, 1
        %s180 = scalar_lea.sflag [#allocation4], %s179
        %s181 = sand.u32 %s29, 1
        %s182 = smul.addr %s181, 8
        %s183 = scalar_lea.vmem [#allocation3], %s182
        // Predicated region
        $region33: #{tpu_custom_call.1} parent=31 // pred_check
          %p184 = pneg %p42
        $region34: #{tpu_custom_call.1} parent=31 // pred_check_branch
          %186 = sbr.rel (%p184) target = $region36
        $region35: #{tpu_custom_call.1} parent=31 // pred_region
          %187 = dma.done %s180, 128
        $region36: #{tpu_custom_call.1} parent=31 // pred_fallthru
          _
        // Predicated region
        $region37: #{tpu_custom_call.1} parent=31 // pred_check
          %p188 = pneg %p63
        $region38: #{tpu_custom_call.1} parent=31 // pred_check_branch
          %190 = sbr.rel (%p188) target = $region40
        $region39: #{tpu_custom_call.1} parent=31 // pred_region
          %191 = dma.done [#allocation7], 64
        $region40: #{tpu_custom_call.1} parent=31 // pred_fallthru
          _
        // Predicated region
        $region41: #{tpu_custom_call.1} parent=31 // pred_check
          %p192 = pneg %p84
        $region42: #{tpu_custom_call.1} parent=31 // pred_check_branch
          %194 = sbr.rel (%p192) target = $region44
        $region43: #{tpu_custom_call.1} parent=31 // pred_region
          %195 = dma.done [#allocation7], 512
        $region44: #{tpu_custom_call.1} parent=31 // pred_fallthru
          _
        %s196 = sand.u32 %s29, 1
        %s197 = scalar_lea.sflag [#allocation4], %s196
        %s198 = sand.u32 %s29, 1
        %s199 = smul.addr %s198, 8
        %s200 = scalar_lea.vmem [#allocation3], %s199
        %p201 = pneg %p42
        %p202 = pneg %p39
        %p203 = pneg %p63
        %p204 = pneg %p60
        %p205 = pneg %p84
        %p206 = pneg %p81
        %p207 = pneg %p110
        %p208 = pneg %p107
        %s209 = sand.u32 %s97, 1
        %s210 = scalar_lea.sflag [#allocation5], %s209
        %s211 = sand.u32 %s97, 1
        %s212 = smul.addr %s211, 8
        %s213 = scalar_lea.vmem [#allocation9], %s212
        %v214 = vld [vmem:[#allocation6] sm:$0xf]
        %v215 = vld [vmem:[#allocation8] ss:$8 sm:$0x3]
        %s216 = scalar_lea.vmem [#allocation8], 1
        %v217 = vld [vmem:[%s216] ss:$8 sm:$0x3]
        %s218 = scalar_lea.vmem [#allocation8], 2
        %v219 = vld [vmem:[%s218] ss:$8 sm:$0x3]
        %s220 = scalar_lea.vmem [#allocation8], 3
        %v221 = vld [vmem:[%s220] ss:$8 sm:$0x3]
        %s222 = scalar_lea.vmem [#allocation8], 5
        %v223 = vld [vmem:[%s222] ss:$8 sm:$0x3]
        %s224 = scalar_lea.vmem [#allocation8], 6
        %v225 = vld [vmem:[%s224] ss:$8 sm:$0x3]
        %s226 = scalar_lea.vmem [#allocation8], 7
        %v227 = vld [vmem:[%s226] ss:$8 sm:$0x3]
        %s228 = scalar_lea.vmem [#allocation8], 16
        %v229 = vld [vmem:[%s228] ss:$8 sm:$0x3]
        %v230 = vld [vmem:[%s183] sm:$0xff]
        %v232 = vcombine.high %v230, %v230
        %234 = vrot.lane.b32.xlu0 %v230, 17
        %v235 = vpop.permute.xlu0 %234
        %236 = vrot.lane.b32.xlu0 %v232, 17
        %v237 = vpop.permute.xlu0 %236
        %v238 = vlaneseq
        %v239 = vand.u32 %v238, 127
        %vm240 = vcmp.lt.s32.totalorder %v239, 17
        %v241 = vsel %vm240, %v235, %v237
        %v242 = vsel %vm240, %v237, %v235
        %v244 = vlaneseq
        %v245 = vshrl.u32 %v244, 7
        %v246 = vsub.s32 0, %v245
        %v247 = vrot.slane %v215, %v246
        %v248 = vlaneseq
        %v249 = vshrl.u32 %v248, 7
        %v250 = vsub.s32 1, %v249
        %v251 = vrot.slane %v215, %v250
        %v254 = vmul.f32 %v242, %v247
        %v255 = vmul.f32 %v241, %v251
        %256 = vst [vmem:[#allocation2] sm:$0xf] %v254
        %257 = vst [vmem:[#allocation2 + $0x8] sm:$0xf] %v255
        %258 = vrot.lane.b32.xlu0 %v230, 16
        %v259 = vpop.permute.xlu0 %258
        %260 = vrot.lane.b32.xlu0 %v232, 16
        %v261 = vpop.permute.xlu0 %260
        %vm262 = vcmp.lt.s32.totalorder %v239, 16
        %v263 = vsel %vm262, %v259, %v261
        %v264 = vsel %vm262, %v261, %v259
        %v266 = vlaneseq
        %v267 = vshrl.u32 %v266, 7
        %v268 = vsub.s32 0, %v267
        %v269 = vrot.slane %v217, %v268
        %v270 = vlaneseq
        %v271 = vshrl.u32 %v270, 7
        %v272 = vsub.s32 1, %v271
        %v273 = vrot.slane %v217, %v272
        %v276 = vmul.f32 %v264, %v269
        %v277 = vmul.f32 %v263, %v273
        %v280 = vrot.slane %v276, 4
        %v281 = vrot.slane %v277, 4
        %284 = vst [vmem:[#allocation2] sm:$0xf0] %v280
        %285 = vst [vmem:[#allocation2 + $0x8] sm:$0xf0] %v281
        %286 = vrot.lane.b32.xlu0 %v230, 15
        %v287 = vpop.permute.xlu0 %286
        %288 = vrot.lane.b32.xlu0 %v232, 15
        %v289 = vpop.permute.xlu0 %288
        %vm290 = vcmp.lt.s32.totalorder %v239, 15
        %v291 = vsel %vm290, %v287, %v289
        %v292 = vsel %vm290, %v289, %v287
        %v294 = vlaneseq
        %v295 = vshrl.u32 %v294, 7
        %v296 = vsub.s32 0, %v295
        %v297 = vrot.slane %v219, %v296
        %v298 = vlaneseq
        %v299 = vshrl.u32 %v298, 7
        %v300 = vsub.s32 1, %v299
        %v301 = vrot.slane %v219, %v300
        %v304 = vmul.f32 %v292, %v297
        %v305 = vmul.f32 %v291, %v301
        %306 = vst [vmem:[#allocation2 + $0x10] sm:$0xf] %v304
        %307 = vst [vmem:[#allocation2 + $0x18] sm:$0xf] %v305
        %308 = vrot.lane.b32.xlu0 %v230, 1
        %v309 = vpop.permute.xlu0 %308
        %310 = vrot.lane.b32.xlu0 %v232, 1
        %v311 = vpop.permute.xlu0 %310
        %vm312 = vcmp.lt.s32.totalorder %v239, 1
        %v313 = vsel %vm312, %v309, %v311
        %v314 = vsel %vm312, %v311, %v309
        %v316 = vlaneseq
        %v317 = vshrl.u32 %v316, 7
        %v318 = vsub.s32 0, %v317
        %v319 = vrot.slane %v221, %v318
        %v320 = vlaneseq
        %v321 = vshrl.u32 %v320, 7
        %v322 = vsub.s32 1, %v321
        %v323 = vrot.slane %v221, %v322
        %v326 = vmul.f32 %v314, %v319
        %v327 = vmul.f32 %v313, %v323
        %v330 = vrot.slane %v326, 4
        %v331 = vrot.slane %v327, 4
        %334 = vst [vmem:[#allocation2 + $0x10] sm:$0xf0] %v330
        %335 = vst [vmem:[#allocation2 + $0x18] sm:$0xf0] %v331
        %336 = vst [vmem:[#allocation2 + $0x20] sm:$0xf] %v230
        %337 = vst [vmem:[#allocation2 + $0x28] sm:$0xf] %v232
        %338 = vrot.lane.b32.xlu0 %v230, 127
        %v339 = vpop.permute.xlu0 %338
        %340 = vrot.lane.b32.xlu0 %v232, 127
        %v341 = vpop.permute.xlu0 %340
        %vm342 = vcmp.lt.s32.totalorder %v239, 127
        %v343 = vsel %vm342, %v339, %v341
        %v344 = vsel %vm342, %v341, %v339
        %v346 = vlaneseq
        %v347 = vshrl.u32 %v346, 7
        %v348 = vsub.s32 0, %v347
        %v349 = vrot.slane %v223, %v348
        %v350 = vlaneseq
        %v351 = vshrl.u32 %v350, 7
        %v352 = vsub.s32 1, %v351
        %v353 = vrot.slane %v223, %v352
        %v356 = vmul.f32 %v343, %v349
        %v357 = vmul.f32 %v344, %v353
        %v360 = vrot.slane %v356, 4
        %v361 = vrot.slane %v357, 4
        %364 = vst [vmem:[#allocation2 + $0x20] sm:$0xf0] %v360
        %365 = vst [vmem:[#allocation2 + $0x28] sm:$0xf0] %v361
        %366 = vrot.lane.b32.xlu0 %v230, 113
        %v367 = vpop.permute.xlu0 %366
        %368 = vrot.lane.b32.xlu0 %v232, 113
        %v369 = vpop.permute.xlu0 %368
        %vm370 = vcmp.lt.s32.totalorder %v239, 113
        %v371 = vsel %vm370, %v367, %v369
        %v372 = vsel %vm370, %v369, %v367
        %v374 = vlaneseq
        %v375 = vshrl.u32 %v374, 7
        %v376 = vsub.s32 0, %v375
        %v377 = vrot.slane %v225, %v376
        %v378 = vlaneseq
        %v379 = vshrl.u32 %v378, 7
        %v380 = vsub.s32 1, %v379
        %v381 = vrot.slane %v225, %v380
        %v384 = vmul.f32 %v371, %v377
        %v385 = vmul.f32 %v372, %v381
        %386 = vst [vmem:[#allocation2 + $0x30] sm:$0xf] %v384
        %387 = vst [vmem:[#allocation2 + $0x38] sm:$0xf] %v385
        %388 = vrot.lane.b32.xlu0 %v230, 112
        %v389 = vpop.permute.xlu0 %388
        %390 = vrot.lane.b32.xlu0 %v232, 112
        %v391 = vpop.permute.xlu0 %390
        %vm392 = vcmp.lt.s32.totalorder %v239, 112
        %v393 = vsel %vm392, %v389, %v391
        %v394 = vsel %vm392, %v391, %v389
        %v396 = vlaneseq
        %v397 = vshrl.u32 %v396, 7
        %v398 = vsub.s32 0, %v397
        %v399 = vrot.slane %v227, %v398
        %v400 = vlaneseq
        %v401 = vshrl.u32 %v400, 7
        %v402 = vsub.s32 1, %v401
        %v403 = vrot.slane %v227, %v402
        %v406 = vmul.f32 %v393, %v399
        %v407 = vmul.f32 %v394, %v403
        %v410 = vrot.slane %v406, 4
        %v411 = vrot.slane %v407, 4
        %414 = vst [vmem:[#allocation2 + $0x30] sm:$0xf0] %v410
        %415 = vst [vmem:[#allocation2 + $0x38] sm:$0xf0] %v411
        %416 = vrot.lane.b32.xlu0 %v230, 111
        %v417 = vpop.permute.xlu0 %416
        %418 = vrot.lane.b32.xlu0 %v232, 111
        %v419 = vpop.permute.xlu0 %418
        %vm420 = vcmp.lt.s32.totalorder %v239, 111
        %v421 = vsel %vm420, %v417, %v419
        %v422 = vsel %vm420, %v419, %v417
        %v424 = vlaneseq
        %v425 = vshrl.u32 %v424, 7
        %v426 = vsub.s32 0, %v425
        %v427 = vrot.slane %v229, %v426
        %v428 = vlaneseq
        %v429 = vshrl.u32 %v428, 7
        %v430 = vsub.s32 1, %v429
        %v431 = vrot.slane %v229, %v430
        %v434 = vmul.f32 %v421, %v427
        %v435 = vmul.f32 %v422, %v431
        %436 = vst [vmem:[#allocation2 + $0x40] sm:$0xf] %v434
        %437 = vst [vmem:[#allocation2 + $0x48] sm:$0xf] %v435
        %v438 = vld [vmem:[#allocation2] sm:$0xff]
        %v439 = vld [vmem:[#allocation2 + $0x8] sm:$0xff]
        %v440 = vld [vmem:[#allocation2 + $0x10] sm:$0xff]
        %v441 = vld [vmem:[#allocation2 + $0x18] sm:$0xff]
        %v442 = vld [vmem:[#allocation2 + $0x20] sm:$0xff]
        %v443 = vld [vmem:[#allocation2 + $0x28] sm:$0xff]
        %v444 = vld [vmem:[#allocation2 + $0x30] sm:$0xff]
        %v445 = vld [vmem:[#allocation2 + $0x38] sm:$0xff]
        %v446 = vld [vmem:[#allocation2 + $0x40] sm:$0xf]
        %v447 = vld [vmem:[#allocation2 + $0x48] sm:$0xf]
        %vm448 = vcmask 293888
        %v450 = vsel %vm448, %v214, 0
        %vm452 = vcmask 1043456
        %v454 = vsel %vm452, %v446, 0
        %v457 = vsel %vm452, %v447, 0
        %459 = vmatprep.subr.mxu0 %v439
        %460 = vmatpush1.msra.mxu0 %v438
        %461 = vmatprep.subr.mxu0 %v441
        %462 = vmatpush1.msra.mxu0 %v440
        %463 = vmatprep.subr.mxu0 %v443
        %464 = vmatpush1.msra.mxu0 %v442
        %465 = vmatprep.subr.mxu0 %v445
        %466 = vmatpush1.msra.mxu0 %v444
        %467 = vmatprep.subr.mxu0 %v457
        %468 = vmatpush1.msra.mxu0 %v454
        %469 = vmatprep.subr.mxu0 0.0
        %470 = vmatpush1.msra.mxu0 0.0
        %471 = vmatprep.subr.mxu0 0.0
        %472 = vmatpush1.msra.mxu0 0.0
        %473 = vmatprep.subr.mxu0 0.0
        %474 = vmatpush1.msra.mxu0 0.0
        %475 = vmatprep.subr.mxu0 0.0
        %476 = vmatpush1.msra.mxu0 0.0
        %477 = vmatprep.subr.mxu0 0.0
        %478 = vmatpush1.msra.mxu0 0.0
        %479 = vmatprep.subr.mxu0 0.0
        %480 = vmatpush1.msra.mxu0 0.0
        %481 = vmatprep.subr.mxu0 0.0
        %482 = vmatpush1.msra.mxu0 0.0
        %483 = vmatprep.subr.mxu0 0.0
        %484 = vmatpush1.msra.mxu0 0.0
        %485 = vmatprep.subr.mxu0 0.0
        %486 = vmatpush1.msra.mxu0 0.0
        %487 = vmatprep.subr.mxu0 0.0
        %488 = vmatpush1.msra.mxu0 0.0
        %489 = vmatprep.subr.mxu0 0.0
        %490 = vmatpush1.msra.mxu0 0.0
        %491 = vmatprep.subr.mxu0 0.0
        %492 = vmatpush1.msra.mxu0 0.0
        %493 = vmatprep.subr.mxu0 0.0
        %494 = vmatpush1.msra.mxu0 0.0
        %495 = vmatprep.subr.mxu0 0.0
        %496 = vmatpush1.msra.mxu0 0.0
        %497 = vmatprep.subr.mxu0 0.0
        %498 = vmatpush1.msra.mxu0 0.0
        %499 = vmatprep.subr.mxu0 0.0
        %500 = vmatpush1.msra.mxu0 0.0
        %501 = vmatprep.subr.mxu0 0.0
        %502 = vmatpush1.msra.mxu0 0.0
        %503 = vmatprep.subr.mxu0 0.0
        %504 = vmatpush1.msra.mxu0 0.0
        %505 = vmatprep.subr.mxu0 0.0
        %506 = vmatpush1.msra.mxu0 0.0
        %507 = vmatprep.subr.mxu0 0.0
        %508 = vmatpush1.msra.mxu0 0.0
        %509 = vmatprep.subr.mxu0 0.0
        %510 = vmatpush1.msra.mxu0 0.0
        %511 = vmatprep.subr.mxu0 0.0
        %512 = vmatpush1.msra.mxu0 0.0
        %513 = vmatprep.subr.mxu0 0.0
        %514 = vmatpush1.msra.mxu0 0.0
        %515 = vmatprep.subr.mxu0 0.0
        %516 = vmatpush1.msra.mxu0 0.0
        %517 = vmatprep.subr.mxu0 0.0
        %518 = vmatpush1.msra.mxu0 0.0
        %519 = vmatprep.subr.mxu0 0.0
        %520 = vmatpush1.msra.mxu0 0.0
        %521 = vmatprep.subr.mxu0 0.0
        %522 = vmatpush1.msra.mxu0 0.0
        %523 = vmatprep.mubr.f32.mxu0 0.0
        %524 = vmatmul.mubr.f32.gmra.mrb[0].mxu0 %v450
        %v525 = vpop.f32.mrb[0].mxu0
        %v526 = vadd.f32 0.0, %v525
        %v527 = vpop.f32.mrb[0].mxu0
        %v528 = vadd.f32 0.0, %v527
        %529 = vdwg.mxu0
        %v530 = vsel %vm452, %v526, 0.0
        %v531 = vsel %vm452, %v528, 0.0
        %v532 = vadd.f32 %v530, %v531
        %533 = vadd.xlane.f32.xlu0 %v532
        %v534 = vpop.xlane.xlu0 %533
        %v535 = vmul.f32 %v534, 0.00390625
        %v536 = vsub.f32 %v526, %v535
        %v537 = vsub.f32 %v528, %v535
        %v538 = vmul.f32 %v536, %v536
        %v539 = vmul.f32 %v537, %v537
        %v540 = vsel %vm452, %v538, 0.0
        %v541 = vsel %vm452, %v539, 0.0
        %v542 = vadd.f32 %v540, %v541
        %543 = vadd.xlane.f32.xlu0 %v542
        %v544 = vpop.xlane.xlu0 %543
        %v545 = vmul.f32 %v544, 0.00390625
        %v546 = vadd.f32 %v545, 1e-05
        %v547 = vrsqrt.pop %v546
        %v548 = vmul.f32 %v536, %v547
        %v549 = vmul.f32 %v537, %v547
        %v550 = vmax.f32 %v548, 0.0
        %v551 = vmax.f32 %v549, 0.0
        %v554 = vcombine.low %v550, %v551
        %556 = vst [vmem:[%s213] sm:$0xff] %v554
        %s557 = sand.u32 %s97, 1
        %s558 = scalar_lea.sflag [#allocation5], %s557
        %s559 = sand.u32 %s97, 1
        %s560 = smul.addr %s559, 8
        %s561 = scalar_lea.vmem [#allocation9], %s560
        // Predicated region
        $region45: #{tpu_custom_call.1} parent=31 // pred_check
          %p562 = pneg %p107
        $region46: #{tpu_custom_call.1} parent=31 // pred_check_branch
          %564 = sbr.rel (%p562) target = $region48
        $region47: #{tpu_custom_call.1} parent=31 // pred_region
          %s566 = ssub.s32 128, 128
          %567 = vsyncadd %s558, %s566
          %s568 = smul.addr %s21, 2
          %s569 = smul.addr %s568, 64
          %s570 = scalar_lea.hbm %s3, %s569
          %s572 = sshll.u32 %s561, 4
          %s573 = int_to_ptr.vmem [resolvable:$true] %s572
          %575 = dma.vmem_to_hbm [thread:$0]  %s573, 128, %s570, %s558
        $region48: #{tpu_custom_call.1} parent=31 // pred_fallthru
          _
      $region32: #{tpu_custom_call.1} parent=5 // pred_fallthru
        _
      %p576 = scmp.le.s32.totalorder 2, %s16
      // Predicated region
      $region49: #{tpu_custom_call.1} parent=5 // pred_check
        %p577 = pneg %p576
      $region50: #{tpu_custom_call.1} parent=5 // pred_check_branch
        %579 = sbr.rel (%p577) target = $region52
      $region51: #{tpu_custom_call.1} parent=5 // pred_region
        %s580 = ssub.s32 %s16, 2
        // Predicated region
        $region53: #{tpu_custom_call.1} parent=51 // pred_check
          %p581 = pneg %p113
        $region54: #{tpu_custom_call.1} parent=51 // pred_check_branch
          %583 = sbr.rel (%p581) target = $region56
        $region55: #{tpu_custom_call.1} parent=51 // pred_region
          %s584 = sand.u32 %s98, 1
          %s585 = scalar_lea.sflag [#allocation5], %s584
          %s586 = sand.u32 %s98, 1
          %s587 = smul.addr %s586, 8
          %s588 = scalar_lea.vmem [#allocation9], %s587
          %589 = dma.done %s585, 128
        $region56: #{tpu_custom_call.1} parent=51 // pred_fallthru
          _
      $region52: #{tpu_custom_call.1} parent=5 // pred_fallthru
        _
    $region6: #{tpu_custom_call.1} parent=1 // loop_footer
      %s20 = sadd.s32 1, %s16
    $region7: #{tpu_custom_call.1} parent=1 // loop_footer_branch
      %15 = sbr.rel target = $region3
    $region8: #{tpu_custom_call.1} parent=1 // loop_exit
      _
    %590 = vsyncpa [#allocation4], 1
    %s591 = scalar_lea.sflag [#allocation4], 1
    %592 = vsyncpa %s591, 1
    %593 = vsyncpa [#allocation7], 1
    %594 = vsyncpa [#allocation5], 1
    %s595 = scalar_lea.sflag [#allocation5], 1
    %596 = vsyncpa %s595, 1

</llo_original>
